<compile_context>
chip_gen: v6e
topology: v6e:2x2x1
jax: 0.10.0
libtpu: 0.0.40
codegen_flags: <defaults>
</compile_context>

<pallas_src>
import functools

import jax
import jax.numpy as jnp
from jax import lax
from jax.experimental import pallas as pl
from jax.experimental.pallas import tpu as pltpu

_LANE = 128
_SUBLANE = 8
_CHUNK_ROWS = 8             # rows per in-kernel loop step (1 f32 vreg / stream)
_MAX_BLOCK_ROWS = 2048      # (2048, 128) f32 block = 1 MiB / stream / step
_APPROX_RECIPROCAL = False  # set True on v7x (VALU-bound) if 1e-4 tol verified


def _cdiv(a, b):
    return -(-a // b)


def _round_up(x, m):
    return _cdiv(x, m) * m


def _pow_weight(base, gamma):
    """base**gamma with small integer gamma lowered to multiplies (trace-time)."""
    g = float(gamma)
    if g == 0.0:
        return jnp.ones_like(base)
    gi = int(g)
    if float(gi) == g and 0 < gi <= 8:
        r = base
        for _ in range(gi - 1):
            r = r * base
        return r
    return base ** g


def _focal_loss_tile(x, t, alpha0, alpha1, gamma):
    """Elementwise focal loss on an f32 tile (single shared exp(-|x|))."""
    e = jnp.exp(-jnp.abs(x))                            # one EUP exp, reused
    # Numerically-stable BCE with logits (matches nn.BCEWithLogitsLoss):
    bce = jnp.maximum(x, 0.0) - x * t + jnp.log1p(e)
    inv = pl.reciprocal(1.0 + e, approx=_APPROX_RECIPROCAL)
    p = jnp.where(x >= 0, inv, e * inv)                 # sigmoid(x), no 2nd exp
    one_minus_pt = p + t * (1.0 - 2.0 * p)              # == t*(1-p) + (1-t)*p
    w = _pow_weight(one_minus_pt, gamma)
    if alpha0 is not None:
        w = (alpha0 + t * (alpha1 - alpha0)) * w        # == t*a1 + (1-t)*a0
    return w * bce


# ---------------------------------------------------------------------------
# Kernels
# ---------------------------------------------------------------------------
def _focal_partial_sum_kernel(x_ref, t_ref, o_ref, *, alpha0, alpha1, gamma,
                              block_rows, n_valid, need_mask):
    """One (block_rows, 128) tile -> one (8, 128) lane-dense partial sum."""
    nchunks = block_rows // _CHUNK_ROWS
    unroll = min(8, nchunks)

    if need_mask:
        # Flat element index of each position inside one chunk (hoisted const).
        elem_in_chunk = (
            lax.broadcasted_iota(jnp.int32, (_CHUNK_ROWS, _LANE), 0) * _LANE
            + lax.broadcasted_iota(jnp.int32, (_CHUNK_ROWS, _LANE), 1))
        block_elem0 = pl.program_id(0) * (block_rows * _LANE)

    def run(masked):
        def body(c, acc):
            r0 = pl.multiple_of(c * _CHUNK_ROWS, _CHUNK_ROWS)
            x = x_ref[pl.ds(r0, _CHUNK_ROWS), :].astype(jnp.float32)
            t = t_ref[pl.ds(r0, _CHUNK_ROWS), :].astype(jnp.float32)
            loss = _focal_loss_tile(x, t, alpha0, alpha1, gamma)
            if masked:
                eidx = block_elem0 + r0 * _LANE + elem_in_chunk
                loss = jnp.where(eidx < n_valid, loss, 0.0)
            return acc + loss

        zero = jnp.zeros((_CHUNK_ROWS, _LANE), jnp.float32)
        return lax.fori_loop(0, nchunks, body, zero, unroll=unroll)

    if not need_mask:
        o_ref[...] = run(False)
    else:
        is_last = pl.program_id(0) == pl.num_programs(0) - 1

        @pl.when(jnp.logical_not(is_last))
        def _():
            o_ref[...] = run(False)          # full interior blocks: no mask cost

        @pl.when(is_last)
        def _():
            o_ref[...] = run(True)           # ragged tail block: element mask


def _focal_elem_kernel(x_ref, t_ref, o_ref, *, alpha0, alpha1, gamma,
                       block_rows):
    """Elementwise focal loss (reduction='none'), chunked to stay in vregs."""
    nchunks = block_rows // _CHUNK_ROWS
    unroll = min(8, nchunks)

    def body(c, carry):
        r0 = pl.multiple_of(c * _CHUNK_ROWS, _CHUNK_ROWS)
        x = x_ref[pl.ds(r0, _CHUNK_ROWS), :].astype(jnp.float32)
        t = t_ref[pl.ds(r0, _CHUNK_ROWS), :].astype(jnp.float32)
        loss = _focal_loss_tile(x, t, alpha0, alpha1, gamma)
        o_ref[pl.ds(r0, _CHUNK_ROWS), :] = loss.astype(o_ref.dtype)
        return carry

    lax.fori_loop(0, nchunks, body, jnp.int32(0), unroll=unroll)


# ---------------------------------------------------------------------------
# Module wrapper
# ---------------------------------------------------------------------------
class FocalLoss:
    """JAX/Pallas re-implementation of the PyTorch FocalLoss module."""

    def __init__(self, alpha, gamma, reduction="mean"):
        # alpha: 2-seq (alpha[0] -> negatives, alpha[1] -> positives) or None
        self.alpha = None if alpha is None else (float(alpha[0]), float(alpha[1]))
        self.gamma = float(gamma)
        self.reduction = reduction

    @staticmethod
    def _layout(n):
        rows = _cdiv(n, _LANE)
        # v7x has 2 TensorCores: keep >= 2 grid steps whenever splittable so
        # the "parallel" axis shards across both.
        min_blocks = 2 if rows >= 2 * _SUBLANE else 1
        nblocks = max(min_blocks, _cdiv(rows, _MAX_BLOCK_ROWS))
        block_rows = _round_up(_cdiv(rows, nblocks), _SUBLANE)
        grid = _cdiv(rows, block_rows)
        return rows, block_rows, grid

    def _as_slab(self, inputs, targets):
        """Lane-dense (rows, 128) views.  Copy-free whenever n % 128 == 0."""
        n = inputs.size
        rows, block_rows, grid = self._layout(n)
        flat_x = inputs.reshape(-1)
        flat_t = targets.reshape(-1)
        pad = rows * _LANE - n
        if pad:
            # Only when n is not a multiple of 128: pad by < 128 zeros so the
            # rectangular (rows, 128) reshape is legal.  Padded elements are
            # masked in-kernel (reduced path) or sliced off ('none' path).
            flat_x = jnp.pad(flat_x, (0, pad))
            flat_t = jnp.pad(flat_t, (0, pad))
        x2 = flat_x.reshape(rows, _LANE)
        t2 = flat_t.reshape(rows, _LANE)
        return x2, t2, rows, block_rows, grid

    # ---------- reduction = 'mean' / 'sum' path ------------------------------
    def _reduced(self, inputs, targets):
        n = inputs.size
        x2, t2, rows, block_rows, grid = self._as_slab(inputs, targets)
        need_mask = (n % (block_rows * _LANE)) != 0

        a0, a1 = self.alpha if self.alpha is not None else (None, None)
        kernel = functools.partial(
            _focal_partial_sum_kernel,
            alpha0=a0, alpha1=a1, gamma=self.gamma,
            block_rows=block_rows, n_valid=n, need_mask=need_mask)

        tile_spec = pl.BlockSpec((block_rows, _LANE), lambda i: (i, 0))
        cost = pl.CostEstimate(
            flops=22 * n, transcendentals=2 * n,
            bytes_accessed=n * (x2.dtype.itemsize + t2.dtype.itemsize)
            + grid * _SUBLANE * _LANE * 4)

        partials = pl.pallas_call(
            kernel,
            out_shape=jax.ShapeDtypeStruct((grid * _SUBLANE, _LANE), jnp.float32),
            grid=(grid,),
            in_specs=[tile_spec, tile_spec],
            out_specs=pl.BlockSpec((_SUBLANE, _LANE), lambda i: (i, 0)),
            compiler_params=pltpu.CompilerParams(
                dimension_semantics=("parallel",)),
            cost_estimate=cost,
        )(x2, t2)

        total = jnp.sum(partials)   # tiny final reduce (better f32 accumulation)
        if self.reduction == "mean":
            return total / jnp.float32(n)
        return total                # 'sum'

    # ---------- reduction = 'none' path ---------------------------------------
    def _elementwise(self, inputs, targets):
        n = inputs.size
        shape = inputs.shape
        x2, t2, rows, block_rows, grid = self._as_slab(inputs, targets)

        a0, a1 = self.alpha if self.alpha is not None else (None, None)
        kernel = functools.partial(
            _focal_elem_kernel, alpha0=a0, alpha1=a1, gamma=self.gamma,
            block_rows=block_rows)

        tile_spec = pl.BlockSpec((block_rows, _LANE), lambda i: (i, 0))
        cost = pl.CostEstimate(
            flops=22 * n, transcendentals=2 * n,
            bytes_accessed=n * (x2.dtype.itemsize + t2.dtype.itemsize
                                + inputs.dtype.itemsize))

        out = pl.pallas_call(
            kernel,
            out_shape=jax.ShapeDtypeStruct((rows, _LANE), inputs.dtype),
            grid=(grid,),
            in_specs=[tile_spec, tile_spec],
            out_specs=tile_spec,
            compiler_params=pltpu.CompilerParams(
                dimension_semantics=("parallel",)),
            cost_estimate=cost,
        )(x2, t2)

        flat = out.reshape(-1)
        if flat.size != n:          # only for n % 128 != 0
            flat = flat[:n]
        return flat.reshape(shape)

    def __call__(self, inputs, targets):
        if self.reduction in ("mean", "sum"):
            return self._reduced(inputs, targets)
        return self._elementwise(inputs, targets)


# ---------------------------------------------------------------------------
# Pure-JAX reference (mirrors the PyTorch module) + tests
# ---------------------------------------------------------------------------
def _reference(inputs, targets, alpha, gamma, reduction):
    x = inputs.astype(jnp.float32)
    t = targets.astype(jnp.float32)
    bce = jnp.maximum(x, 0.0) - x * t + jnp.log1p(jnp.exp(-jnp.abs(x)))
    p = jax.nn.sigmoid(x)
    p_t = t * p + (1.0 - t) * (1.0 - p)
    fw = (1.0 - p_t) ** gamma
    if alpha is not None:
        fw = (t * alpha[1] + (1.0 - t) * alpha[0]) * fw
    loss = fw * bce
    if reduction == "mean":
        return loss.mean()
    if reduction == "sum":
        return loss.sum()
    return loss


if __name__ == "__main__":
    key = jax.random.PRNGKey(0)
    k1, k2 = jax.random.split(key)

    # Deterministic module "parameters" (from __init__):
    alpha = (0.25, 0.75)
    gamma = 2.0

    # Main example: NCHW-like logits/binary targets, n = 2048 (128-aligned,
    # zero-copy path, grid = 2 so both v7x TensorCores engage).
    x = jax.random.normal(k1, (2, 4, 16, 16), dtype=jnp.float32)
    t = (jax.random.uniform(k2, (2, 4, 16, 16)) > 0.5).astype(jnp.float32)

    loss_mean = jax.block_until_ready(FocalLoss(alpha, gamma, "mean")(x, t))
    ref_mean = _reference(x, t, alpha, gamma, "mean")
    assert jnp.allclose(loss_mean, ref_mean, rtol=1e-4, atol=1e-6), (loss_mean, ref_mean)

    loss_sum = jax.block_until_ready(FocalLoss(alpha, gamma, "sum")(x, t))
    ref_sum = _reference(x, t, alpha, gamma, "sum")
    assert jnp.allclose(loss_sum, ref_sum, rtol=1e-4, atol=1e-4), (loss_sum, ref_sum)

    loss_none = jax.block_until_ready(FocalLoss(alpha, gamma, "none")(x, t))
    assert loss_none.shape == x.shape
    assert jnp.allclose(loss_none, _reference(x, t, alpha, gamma, "none"),
                        rtol=1e-4, atol=1e-6)

    # 128-aligned but block-ragged size (23*128 elements): exercises the
    # in-kernel tail mask with NO wrapper-side padding.
    xr = jax.random.normal(k1, (23, 128), dtype=jnp.float32)
    tr = (jax.random.uniform(k2, (23, 128)) > 0.5).astype(jnp.float32)
    lr = jax.block_until_ready(FocalLoss(alpha, gamma, "mean")(xr, tr))
    assert jnp.allclose(lr, _reference(xr, tr, alpha, gamma, "mean"),
                        rtol=1e-4, atol=1e-6), (lr,)

    # Non-128-aligned size: single < 128-element zero pad + in-kernel mask.
    x2 = jax.random.normal(k1, (3, 5, 7, 11), dtype=jnp.float32)
    t2 = (jax.random.uniform(k2, (3, 5, 7, 11)) > 0.5).astype(jnp.float32)
    l2 = jax.block_until_ready(FocalLoss(alpha, gamma, "mean")(x2, t2))
    assert jnp.allclose(l2, _reference(x2, t2, alpha, gamma, "mean"),
                        rtol=1e-4, atol=1e-6), (l2,)
    l2n = jax.block_until_ready(FocalLoss(alpha, gamma, "none")(x2, t2))
    assert jnp.allclose(l2n, _reference(x2, t2, alpha, gamma, "none"),
                        rtol=1e-4, atol=1e-6)

    # alpha = None path.
    l3 = jax.block_until_ready(FocalLoss(None, gamma, "sum")(x, t))
    assert jnp.allclose(l3, _reference(x, t, None, gamma, "sum"),
                        rtol=1e-4, atol=1e-4)

    print("KERNEL_OK")
</pallas_src>

<mosaic_0001>
module attributes {stable_mosaic.version = 11 : i64} {
  func.func @_focal_partial_sum_kernel(%arg0: i32, %arg1: memref<8x128xf32, #tpu.memory_space<vmem>>, %arg2: memref<8x128xf32, #tpu.memory_space<vmem>>, %arg3: memref<8x128xf32, #tpu.memory_space<vmem>>) attributes {dimension_semantics = [#tpu.dimension_semantics<parallel>], iteration_bounds = array<i64: 2>, scalar_prefetch = 0 : i64, scratch_operands = 0 : i64, tpu.core_type = #tpu.core_type<tc>, window_params = [{transform_indices = @transform_0, window_bounds = array<i64: 8, 128>}, {transform_indices = @transform_1, window_bounds = array<i64: 8, 128>}, {transform_indices = @transform_2, window_bounds = array<i64: 8, 128>}]} {
    %cst = arith.constant 0.000000e+00 : f32
    %0 = vector.broadcast %cst : f32 to vector<8x128xf32>
    %c0_i32 = arith.constant 0 : i32
    %c8_i32 = arith.constant 8 : i32
    %1 = arith.muli %c0_i32, %c8_i32 : i32
    %2 = tpu.assume_multiple %1, 8 : i32
    %3 = arith.index_cast %2 : i32 to index
    %c0 = arith.constant 0 : index
    %4 = vector.load %arg1[%3, %c0] : memref<8x128xf32, #tpu.memory_space<vmem>>, vector<8x128xf32>
    %5 = arith.index_cast %2 : i32 to index
    %c0_0 = arith.constant 0 : index
    %6 = vector.load %arg2[%5, %c0_0] : memref<8x128xf32, #tpu.memory_space<vmem>>, vector<8x128xf32>
    %7 = math.absf %4 : vector<8x128xf32>
    %cst_1 = arith.constant 0.000000e+00 : f32
    %8 = vector.broadcast %cst_1 : f32 to vector<8x128xf32>
    %9 = arith.subf %8, %7 : vector<8x128xf32>
    %10 = math.exp %9 : vector<8x128xf32>
    %cst_2 = arith.constant 0.000000e+00 : f32
    %11 = vector.broadcast %cst_2 : f32 to vector<8x128xf32>
    %12 = arith.maximumf %4, %11 : vector<8x128xf32>
    %13 = arith.mulf %4, %6 : vector<8x128xf32>
    %14 = arith.subf %12, %13 : vector<8x128xf32>
    %15 = math.log1p %10 : vector<8x128xf32>
    %16 = arith.addf %14, %15 : vector<8x128xf32>
    %cst_3 = arith.constant 1.000000e+00 : f32
    %17 = vector.broadcast %cst_3 : f32 to vector<8x128xf32>
    %18 = arith.addf %17, %10 : vector<8x128xf32>
    %19 = tpu.reciprocal %18 : vector<8x128xf32> -> vector<8x128xf32>
    %cst_4 = arith.constant 0.000000e+00 : f32
    %20 = vector.broadcast %cst_4 : f32 to vector<8x128xf32>
    %21 = arith.cmpf oge, %4, %20 : vector<8x128xf32>
    %22 = arith.mulf %10, %19 : vector<8x128xf32>
    %23 = arith.select %21, %19, %22 : vector<8x128xi1>, vector<8x128xf32>
    %cst_5 = arith.constant 2.000000e+00 : f32
    %24 = vector.broadcast %cst_5 : f32 to vector<8x128xf32>
    %25 = arith.mulf %24, %23 : vector<8x128xf32>
    %cst_6 = arith.constant 1.000000e+00 : f32
    %26 = vector.broadcast %cst_6 : f32 to vector<8x128xf32>
    %27 = arith.subf %26, %25 : vector<8x128xf32>
    %28 = arith.mulf %6, %27 : vector<8x128xf32>
    %29 = arith.addf %23, %28 : vector<8x128xf32>
    %30 = arith.mulf %29, %29 : vector<8x128xf32>
    %cst_7 = arith.constant 5.000000e-01 : f32
    %31 = vector.broadcast %cst_7 : f32 to vector<8x128xf32>
    %32 = arith.mulf %6, %31 : vector<8x128xf32>
    %cst_8 = arith.constant 2.500000e-01 : f32
    %33 = vector.broadcast %cst_8 : f32 to vector<8x128xf32>
    %34 = arith.addf %33, %32 : vector<8x128xf32>
    %35 = arith.mulf %34, %30 : vector<8x128xf32>
    %36 = arith.mulf %35, %16 : vector<8x128xf32>
    %37 = arith.addf %0, %36 : vector<8x128xf32>
    %c1_i32 = arith.constant 1 : i32
    %c0_9 = arith.constant 0 : index
    %c0_10 = arith.constant 0 : index
    %38 = vector.load %arg3[%c0_9, %c0_10] : memref<8x128xf32, #tpu.memory_space<vmem>>, vector<8x128xf32>
    tpu.vector_store %arg3[%c0_9, %c0_10], %37 {strides = array<i32>} : memref<8x128xf32, #tpu.memory_space<vmem>>, vector<8x128xf32>,
    return
  }
  func.func @transform_0(%arg0: i32) -> (i32, i32) {
    %c0_i32 = arith.constant 0 : i32
    %c0_i32_0 = arith.constant 0 : i32
    return %arg0, %c0_i32 : i32, i32
  }
  func.func @transform_1(%arg0: i32) -> (i32, i32) {
    %c0_i32 = arith.constant 0 : i32
    %c0_i32_0 = arith.constant 0 : i32
    return %arg0, %c0_i32 : i32, i32
  }
  func.func @transform_2(%arg0: i32) -> (i32, i32) {
    %c0_i32 = arith.constant 0 : i32
    %c0_i32_0 = arith.constant 0 : i32
    return %arg0, %c0_i32 : i32, i32
  }
}

</mosaic_0001>

<llo_original>
// kernel: tpu_custom_call.1
$region0: #{tpu_custom_call.1}
  #allocation0 [shape = 'u32[]', space=smem, size = 0x4, offset = 0x4, fixed_abs, tag = 'smem constant byte address 0x4 - core index']
  #allocation1 [shape = 'u32[144,128]{1,0:T(1,128)}', space=vmem, size = 0x12000, scoped, tag = 'internal scratch']
  %s0 = inlined_call_operand.hbm [shape: f32[16,128], index: 0, kind: input, shape index: {}]
  %s1 = inlined_call_operand.hbm [shape: f32[16,128], index: 1, kind: input, shape index: {}]
  %s2 = inlined_call_operand.hbm [shape: f32[16,128], index: 2, kind: output, shape index: {}]
  %s3 = sld [smem:[#allocation0]]
  $region49: #{tpu_custom_call.1} parent=0
    _
  %s5 = ssub.s32 1, %s3
  %s6 = scalar_select 0, %s5, %s3
  $region1: #{tpu_custom_call.1} parent=0
    #allocation2 [shape = 'u8[8192]{0}', space=vmem, size = 0x2000, scoped, tag = 'input window, operand 0']
    #allocation3 [shape = 's32[2]{0}', space=sflag, size = 0x8, scoped, tag = 'scoped memory for tpu_custom_call.1']
    #allocation4 [shape = 's32[2]{0}', space=sflag, size = 0x8, scoped, tag = 'scoped memory for tpu_custom_call.1']
    #allocation5 [shape = 'u8[8192]{0}', space=vmem, size = 0x2000, scoped, tag = 'input window, operand 1']
    #allocation6 [shape = 's32[2]{0}', space=sflag, size = 0x8, scoped, tag = 'scoped memory for tpu_custom_call.1']
    #allocation7 [shape = 'u8[8192]{0}', space=vmem, size = 0x2000, scoped, tag = 'output window, operand 0']
    %7 = vsyncpa [#allocation3], 0
    %s8 = scalar_lea.sflag [#allocation3], 1
    %9 = vsyncpa %s8, 0
    %10 = vsyncpa [#allocation6], 0
    %s11 = scalar_lea.sflag [#allocation6], 1
    %12 = vsyncpa %s11, 0
    %13 = vsyncpa [#allocation4], 0
    %s14 = scalar_lea.sflag [#allocation4], 1
    %15 = vsyncpa %s14, 0
    loop: start=0, step=1, limit=4
    $region2: #{tpu_custom_call.1} parent=1 // loop_pre_header
      _
    $region3: #{tpu_custom_call.1} parent=1 // loop_header
      %s17 = sphi 0, %s21
      %p18 = scmp.ge.s32.totalorder %s17, 4
      %s27 = sphi 0, %s29
      %s30 = sphi 0, %s27
      %s31 = sphi 0, %s30
      %s47 = sphi 0, %s31
      %s53 = sphi 0, %s55
      %s56 = sphi 0, %s53
      %s57 = sphi 0, %s56
      %s73 = sphi 0, %s57
      %s79 = sphi 0, %s81
      %s82 = sphi 0, %s79
      %s83 = sphi 0, %s82
      %s99 = sphi 0, %s83
    $region4: #{tpu_custom_call.1} parent=1 // loop_header_branch
      %20 = sbr.rel (%p18) target = $region8
    $region5: #{tpu_custom_call.1} parent=1 // loop_body
      %s22 = ssub.s32 %s17, 1
      %s23 = ssub.s32 %s17, 2
      %s24 = sadd.s32 %s17, 1
      %s25 = ssub.s32 %s17, %s24
      %p26 = scmp.eq.s32.totalorder %s25, 0
      %s28 = sadd.s32 %s27, 1
      %s29 = scalar_select %p26, %s27, %s28
      %p32 = pneg %p26
      %p33 = scmp.eq.s32.totalorder %s17, 1
      %p34 = por %p32, %p33
      %p35 = scmp.ne.s32.totalorder %s27, %s30
      %p36 = scmp.eq.s32.totalorder %s17, 0
      %p37 = por %p35, %p36
      %p38 = scmp.ne.s32.totalorder %s27, %s30
      %p39 = scmp.eq.s32.totalorder %s22, 1
      %p40 = por %p38, %p39
      %p41 = scmp.ne.s32.totalorder %s30, %s31
      %p42 = scmp.eq.s32.totalorder %s22, 0
      %p43 = por %p41, %p42
      %p44 = scmp.ne.s32.totalorder %s30, %s31
      %p45 = scmp.eq.s32.totalorder %s23, 1
      %p46 = por %p44, %p45
      %p48 = scmp.ne.s32.totalorder %s31, %s47
      %p49 = scmp.eq.s32.totalorder %s23, 0
      %p50 = por %p48, %p49
      %s51 = ssub.s32 %s17, %s24
      %p52 = scmp.eq.s32.totalorder %s51, 0
      %s54 = sadd.s32 %s53, 1
      %s55 = scalar_select %p52, %s53, %s54
      %p58 = pneg %p52
      %p59 = scmp.eq.s32.totalorder %s17, 1
      %p60 = por %p58, %p59
      %p61 = scmp.ne.s32.totalorder %s53, %s56
      %p62 = scmp.eq.s32.totalorder %s17, 0
      %p63 = por %p61, %p62
      %p64 = scmp.ne.s32.totalorder %s53, %s56
      %p65 = scmp.eq.s32.totalorder %s22, 1
      %p66 = por %p64, %p65
      %p67 = scmp.ne.s32.totalorder %s56, %s57
      %p68 = scmp.eq.s32.totalorder %s22, 0
      %p69 = por %p67, %p68
      %p70 = scmp.ne.s32.totalorder %s56, %s57
      %p71 = scmp.eq.s32.totalorder %s23, 1
      %p72 = por %p70, %p71
      %p74 = scmp.ne.s32.totalorder %s57, %s73
      %p75 = scmp.eq.s32.totalorder %s23, 0
      %p76 = por %p74, %p75
      %s77 = ssub.s32 %s17, %s24
      %p78 = scmp.eq.s32.totalorder %s77, 0
      %s80 = sadd.s32 %s79, 1
      %s81 = scalar_select %p78, %s79, %s80
      %p84 = pneg %p78
      %p85 = scmp.eq.s32.totalorder %s17, 1
      %p86 = por %p84, %p85
      %p87 = scmp.ne.s32.totalorder %s79, %s82
      %p88 = scmp.eq.s32.totalorder %s17, 0
      %p89 = por %p87, %p88
      %p90 = scmp.ne.s32.totalorder %s79, %s82
      %p91 = scmp.eq.s32.totalorder %s22, 1
      %p92 = por %p90, %p91
      %p93 = scmp.ne.s32.totalorder %s82, %s83
      %p94 = scmp.eq.s32.totalorder %s22, 0
      %p95 = por %p93, %p94
      %p96 = scmp.ne.s32.totalorder %s82, %s83
      %p97 = scmp.eq.s32.totalorder %s23, 1
      %p98 = por %p96, %p97
      %p100 = scmp.ne.s32.totalorder %s83, %s99
      %p101 = scmp.eq.s32.totalorder %s23, 0
      %p102 = por %p100, %p101
      %p103 = scmp.le.s32.totalorder 1, %s17
      %p104 = scmp.lt.s32.totalorder %s17, 3
      %p105 = pnand %p103, %p104
      %p106 = pneg %p105
      // Predicated region
      $region9: #{tpu_custom_call.1} parent=5 // pred_check
        _
      $region10: #{tpu_custom_call.1} parent=5 // pred_check_branch
        %108 = sbr.rel (%p105) target = $region12
      $region11: #{tpu_custom_call.1} parent=5 // pred_region
        %s109 = ssub.s32 %s17, 1
      $region12: #{tpu_custom_call.1} parent=5 // pred_fallthru
        _
      %p110 = scmp.lt.s32.totalorder %s17, 2
      // Predicated region
      $region13: #{tpu_custom_call.1} parent=5 // pred_check
        %p111 = pneg %p110
      $region14: #{tpu_custom_call.1} parent=5 // pred_check_branch
        %113 = sbr.rel (%p111) target = $region16
      $region15: #{tpu_custom_call.1} parent=5 // pred_region
        // Predicated region
        $region17: #{tpu_custom_call.1} parent=15 // pred_check
          %p114 = pneg %p37
        $region18: #{tpu_custom_call.1} parent=15 // pred_check_branch
          %116 = sbr.rel (%p114) target = $region20
        $region19: #{tpu_custom_call.1} parent=15 // pred_region
          %s117 = sand.u32 %s27, 1
          %s118 = scalar_lea.sflag [#allocation3], %s117
          %s119 = sand.u32 %s27, 1
          %s120 = smul.addr %s119, 8
          %s121 = scalar_lea.vmem [#allocation2], %s120
          %s123 = ssub.s32 128, 128
          %124 = vsyncadd %s118, %s123
          %s125 = smul.addr %s17, 128
          %s126 = scalar_lea.hbm %s0, %s125
          %s128 = sshll.u32 %s121, 4
          %s129 = int_to_ptr.vmem [resolvable:$true] %s128
          %131 = dma.hbm_to_vmem [thread:$0]  %s126, 128, %s129, %s118
        $region20: #{tpu_custom_call.1} parent=15 // pred_fallthru
          _
        // Predicated region
        $region21: #{tpu_custom_call.1} parent=15 // pred_check
          %p132 = pneg %p63
        $region22: #{tpu_custom_call.1} parent=15 // pred_check_branch
          %134 = sbr.rel (%p132) target = $region24
        $region23: #{tpu_custom_call.1} parent=15 // pred_region
          %s135 = sand.u32 %s53, 1
          %s136 = scalar_lea.sflag [#allocation6], %s135
          %s137 = sand.u32 %s53, 1
          %s138 = smul.addr %s137, 8
          %s139 = scalar_lea.vmem [#allocation5], %s138
          %s141 = ssub.s32 128, 128
          %142 = vsyncadd %s136, %s141
          %s143 = smul.addr %s17, 128
          %s144 = scalar_lea.hbm %s1, %s143
          %s146 = sshll.u32 %s139, 4
          %s147 = int_to_ptr.vmem [resolvable:$true] %s146
          %149 = dma.hbm_to_vmem [thread:$0]  %s144, 128, %s147, %s136
        $region24: #{tpu_custom_call.1} parent=15 // pred_fallthru
          _
      $region16: #{tpu_custom_call.1} parent=5 // pred_fallthru
        _
      %p150 = scmp.le.s32.totalorder 1, %s17
      %p151 = scmp.lt.s32.totalorder %s17, 3
      %p152 = pnand %p150, %p151
      %p153 = pneg %p152
      // Predicated region
      $region25: #{tpu_custom_call.1} parent=5 // pred_check
        _
      $region26: #{tpu_custom_call.1} parent=5 // pred_check_branch
        %155 = sbr.rel (%p152) target = $region28
      $region27: #{tpu_custom_call.1} parent=5 // pred_region
        %s156 = ssub.s32 %s17, 1
        %s157 = sand.u32 %s30, 1
        %s158 = scalar_lea.sflag [#allocation3], %s157
        %s159 = sand.u32 %s30, 1
        %s160 = smul.addr %s159, 8
        %s161 = scalar_lea.vmem [#allocation2], %s160
        // Predicated region
        $region29: #{tpu_custom_call.1} parent=27 // pred_check
          %p162 = pneg %p43
        $region30: #{tpu_custom_call.1} parent=27 // pred_check_branch
          %164 = sbr.rel (%p162) target = $region32
        $region31: #{tpu_custom_call.1} parent=27 // pred_region
          %165 = dma.done %s158, 128
        $region32: #{tpu_custom_call.1} parent=27 // pred_fallthru
          _
        %s166 = sand.u32 %s56, 1
        %s167 = scalar_lea.sflag [#allocation6], %s166
        %s168 = sand.u32 %s56, 1
        %s169 = smul.addr %s168, 8
        %s170 = scalar_lea.vmem [#allocation5], %s169
        // Predicated region
        $region33: #{tpu_custom_call.1} parent=27 // pred_check
          %p171 = pneg %p69
        $region34: #{tpu_custom_call.1} parent=27 // pred_check_branch
          %173 = sbr.rel (%p171) target = $region36
        $region35: #{tpu_custom_call.1} parent=27 // pred_region
          %174 = dma.done %s167, 128
        $region36: #{tpu_custom_call.1} parent=27 // pred_fallthru
          _
        %s175 = sand.u32 %s30, 1
        %s176 = scalar_lea.sflag [#allocation3], %s175
        %s177 = sand.u32 %s30, 1
        %s178 = smul.addr %s177, 8
        %s179 = scalar_lea.vmem [#allocation2], %s178
        %p180 = pneg %p43
        %p181 = pneg %p40
        %s182 = sand.u32 %s56, 1
        %s183 = scalar_lea.sflag [#allocation6], %s182
        %s184 = sand.u32 %s56, 1
        %s185 = smul.addr %s184, 8
        %s186 = scalar_lea.vmem [#allocation5], %s185
        %p187 = pneg %p69
        %p188 = pneg %p66
        %p189 = pneg %p95
        %p190 = pneg %p92
        %s191 = sand.u32 %s82, 1
        %s192 = scalar_lea.sflag [#allocation4], %s191
        %s193 = sand.u32 %s82, 1
        %s194 = smul.addr %s193, 8
        %s195 = scalar_lea.vmem [#allocation7], %s194
        %v196 = vld [vmem:[%s161] sm:$0xff]
        %v197 = vld [vmem:[%s170] sm:$0xff]
        %v198 = vand.u32 2147483647, %v196
        %v199 = vsub.f32 0.0, %v198
        %v200 = vmul.f32 %v199, 1.442695
        %v201 = vpow.pop %v200
        %v202 = vmax.f32 %v196, 0.0
        %v203 = vmul.f32 %v196, %v197
        %v204 = vsub.f32 %v202, %v203
        %v205 = vadd.f32 %v201, 1.0
        %v206 = vlog2.pop %v205
        %v207 = vmul.f32 %v206, 0.6931472
        %v208 = vmul.f32 -0.5, %v201
        %v209 = vadd.f32 %v208, 1.0
        %v210 = vmul.f32 %v209, %v201
        %v211 = vand.u32 2147483647, %v201
        %vm212 = vcmp.lt.f32.partialorder %v211, 0.0004427343
        %v213 = vsel %vm212, %v210, %v207
        %v214 = vadd.f32 %v204, %v213
        %v215 = vadd.f32 %v201, 1.0
        %v216 = vrcp.pop %v215
        %vm217 = vcmp.ge.f32.partialorder %v196, 0.0
        %v218 = vmul.f32 %v201, %v216
        %v219 = vsel %vm217, %v216, %v218
        %v220 = vmul.f32 %v219, 2.0
        %v221 = vsub.f32 1.0, %v220
        %v222 = vmul.f32 %v197, %v221
        %v223 = vadd.f32 %v219, %v222
        %v224 = vmul.f32 %v223, %v223
        %v225 = vmul.f32 %v197, 0.5
        %v226 = vadd.f32 %v225, 0.25
        %v227 = vmul.f32 %v226, %v224
        %v228 = vmul.f32 %v227, %v214
        %v229 = vadd.f32 %v228, 0.0
        %230 = vst [vmem:[%s195] sm:$0xff] %v229
        %s231 = sand.u32 %s82, 1
        %s232 = scalar_lea.sflag [#allocation4], %s231
        %s233 = sand.u32 %s82, 1
        %s234 = smul.addr %s233, 8
        %s235 = scalar_lea.vmem [#allocation7], %s234
        // Predicated region
        $region37: #{tpu_custom_call.1} parent=27 // pred_check
          %p236 = pneg %p92
        $region38: #{tpu_custom_call.1} parent=27 // pred_check_branch
          %238 = sbr.rel (%p236) target = $region40
        $region39: #{tpu_custom_call.1} parent=27 // pred_region
          %s240 = ssub.s32 128, 128
          %241 = vsyncadd %s232, %s240
          %s242 = smul.addr %s22, 128
          %s243 = scalar_lea.hbm %s2, %s242
          %s245 = sshll.u32 %s235, 4
          %s246 = int_to_ptr.vmem [resolvable:$true] %s245
          %248 = dma.vmem_to_hbm [thread:$0]  %s246, 128, %s243, %s232
        $region40: #{tpu_custom_call.1} parent=27 // pred_fallthru
          _
      $region28: #{tpu_custom_call.1} parent=5 // pred_fallthru
        _
      %p249 = scmp.le.s32.totalorder 2, %s17
      // Predicated region
      $region41: #{tpu_custom_call.1} parent=5 // pred_check
        %p250 = pneg %p249
      $region42: #{tpu_custom_call.1} parent=5 // pred_check_branch
        %252 = sbr.rel (%p250) target = $region44
      $region43: #{tpu_custom_call.1} parent=5 // pred_region
        %s253 = ssub.s32 %s17, 2
        // Predicated region
        $region45: #{tpu_custom_call.1} parent=43 // pred_check
          %p254 = pneg %p98
        $region46: #{tpu_custom_call.1} parent=43 // pred_check_branch
          %256 = sbr.rel (%p254) target = $region48
        $region47: #{tpu_custom_call.1} parent=43 // pred_region
          %s257 = sand.u32 %s83, 1
          %s258 = scalar_lea.sflag [#allocation4], %s257
          %s259 = sand.u32 %s83, 1
          %s260 = smul.addr %s259, 8
          %s261 = scalar_lea.vmem [#allocation7], %s260
          %262 = dma.done %s258, 128
        $region48: #{tpu_custom_call.1} parent=43 // pred_fallthru
          _
      $region44: #{tpu_custom_call.1} parent=5 // pred_fallthru
        _
    $region6: #{tpu_custom_call.1} parent=1 // loop_footer
      %s21 = sadd.s32 1, %s17
    $region7: #{tpu_custom_call.1} parent=1 // loop_footer_branch
      %16 = sbr.rel target = $region3
    $region8: #{tpu_custom_call.1} parent=1 // loop_exit
      _
    %263 = vsyncpa [#allocation3], 1
    %s264 = scalar_lea.sflag [#allocation3], 1
    %265 = vsyncpa %s264, 1
    %266 = vsyncpa [#allocation6], 1
    %s267 = scalar_lea.sflag [#allocation6], 1
    %268 = vsyncpa %s267, 1
    %269 = vsyncpa [#allocation4], 1
    %s270 = scalar_lea.sflag [#allocation4], 1
    %271 = vsyncpa %s270, 1

</llo_original>
